<compile_context>
chip_gen: v6e
topology: v6e:2x2x1
jax: 0.10.0
libtpu: 0.0.40
codegen_flags: <defaults>
</compile_context>

<pallas_src>
import math
import functools

import jax
import jax.numpy as jnp
from jax.experimental import pallas as pl
from jax.experimental.pallas import tpu as pltpu

_LANES = 128
_MAX_TILE_ROWS = 4096            # 4096 x 128 x 4 B = 2 MiB per f32 input block
_MIN_ALIGN = 16 * _LANES         # kernel prefix aligned to 16x128 (bf16-safe rows)
_VMEM_LIMIT_BYTES = 40 * 1024 * 1024   # 2 in x 2 bufs x 2 MiB + f32 temps, < v7x 64 MiB


def _logcosh_partial_kernel(yp_ref, yt_ref, out_ref, *,
                            tile_rows, tiles_per_shard, rows_valid):
    c = pl.program_id(0)      # shard (one per TensorCore on v7x)
    i = pl.program_id(1)      # row-tile within shard (reduction axis, last)

    # Zero this shard's resident accumulator slab at the start of its reduction.
    @pl.when(i == 0)
    def _():
        out_ref[...] = jnp.zeros_like(out_ref)

    # Load at native dtype, compute in f32.  (-log(2) is hoisted to the wrapper.)
    d = yp_ref[...].astype(jnp.float32) - yt_ref[...].astype(jnp.float32)
    ad = jnp.abs(d)
    lc = ad + jnp.log1p(jnp.exp(-2.0 * ad))

    def fold(x):
        # Pure-VPU fold into one vreg-shaped (8, 128) slab (layout-free reshape,
        # no cross-lane XLU reduce inside the hot loop).
        return jnp.sum(x.reshape(tile_rows // 8, 8, _LANES), axis=0)

    t = c * tiles_per_shard + i                       # logical (un-clamped) tile
    tile_is_full = (t + 1) * tile_rows <= rows_valid  # scalar

    # Interior tiles (the overwhelming majority) skip the mask entirely.
    @pl.when(tile_is_full)
    def _():
        out_ref[0] += fold(lc)

    # Last (partial) tile and clamped shard-overshoot tiles: keep only rows
    # < rows_valid.  Columns are always full (the wrapper folds the sub-2048
    # element tail), so a single row-level compare suffices — no flat-index
    # arithmetic, no int32 overflow risk.
    @pl.when(jnp.logical_not(tile_is_full))
    def _():
        row = t * tile_rows + jax.lax.broadcasted_iota(jnp.int32, lc.shape, 0)
        out_ref[0] += fold(jnp.where(row < rows_valid, lc, 0.0))


def _prep(x):
    # Pass f32/bf16 through at native dtype (kernel casts); upcast the rest.
    if x.dtype not in (jnp.float32, jnp.bfloat16):
        x = x.astype(jnp.float32)
    return jnp.ravel(x)


def _log_cosh_core(d32):
    ad = jnp.abs(d32)
    return ad + jnp.log1p(jnp.exp(-2.0 * ad))


def _tensorcores_per_chip() -> int:
    # 2-way shard split only on v7x (2 TensorCores per chip); v5e/v6e have one
    # TC, where the extra shard axis is pure overhead.
    try:
        kind = jax.devices()[0].device_kind.lower()
    except Exception:
        return 1
    return 2 if ("v7" in kind or "tpu7" in kind.replace(" ", "")) else 1


def _log_cosh_loss_impl(y_pred: jax.Array, y_true: jax.Array) -> jax.Array:
    assert y_pred.shape == y_true.shape, (y_pred.shape, y_true.shape)
    n_true = int(y_pred.size)
    if n_true == 0:
        return jnp.float32(math.nan)   # matches torch.mean of an empty tensor

    yp = _prep(y_pred)
    yt = _prep(y_true)

    n_main = (n_true // _MIN_ALIGN) * _MIN_ALIGN
    total = jnp.zeros((), jnp.float32)

    if n_main > 0:
        rows = n_main // _LANES                       # multiple of 16
        tile_rows = min(_MAX_TILE_ROWS, rows)         # multiple of 16
        num_tiles = pl.cdiv(rows, tile_rows)
        num_shards = max(1, min(_tensorcores_per_chip(), num_tiles))
        tiles_per_shard = pl.cdiv(num_tiles, num_shards)

        yp2 = yp[:n_main].reshape(rows, _LANES)
        yt2 = yt[:n_main].reshape(rows, _LANES)

        def in_map(c, i):
            # Clamp shard-overshoot tiles onto a valid block; the in-kernel row
            # mask zeroes their contribution, so re-reading a valid block is safe.
            return (jnp.minimum(c * tiles_per_shard + i, num_tiles - 1), 0)

        kernel = functools.partial(
            _logcosh_partial_kernel,
            tile_rows=tile_rows,
            tiles_per_shard=tiles_per_shard,
            rows_valid=rows,
        )

        partials = pl.pallas_call(
            kernel,
            out_shape=jax.ShapeDtypeStruct((num_shards, 8, _LANES), jnp.float32),
            grid_spec=pltpu.PrefetchScalarGridSpec(
                num_scalar_prefetch=0,
                grid=(num_shards, tiles_per_shard),
                in_specs=[
                    pl.BlockSpec((tile_rows, _LANES), in_map),
                    pl.BlockSpec((tile_rows, _LANES), in_map),
                ],
                out_specs=pl.BlockSpec((1, 8, _LANES), lambda c, i: (c, 0, 0)),
            ),
            compiler_params=pltpu.CompilerParams(
                dimension_semantics=("parallel", "arbitrary"),
                vmem_limit_bytes=_VMEM_LIMIT_BYTES,
            ),
        )(yp2, yt2)
        total = total + jnp.sum(partials)

    if n_main < n_true:
        # Sub-2048-element tail handled with a tiny plain-jnp fold; avoids a
        # full jnp.pad copy of both inputs for unaligned sizes.
        d_tail = yp[n_main:].astype(jnp.float32) - yt[n_main:].astype(jnp.float32)
        total = total + jnp.sum(_log_cosh_core(d_tail))

    # mean(log cosh) = (sum of core terms) / N - log(2); 1/N computed in host f64.
    return total * jnp.float32(1.0 / n_true) - jnp.float32(math.log(2.0))


log_cosh_loss = jax.jit(_log_cosh_loss_impl)


class LogCoshLoss:
    """JAX/Pallas equivalent of the PyTorch LogCoshLoss module."""

    def __call__(self, y_pred, y_true):
        return log_cosh_loss(y_pred, y_true)


def _reference(y_pred, y_true):
    d = y_pred.astype(jnp.float32) - y_true.astype(jnp.float32)
    ad = jnp.abs(d)
    return jnp.mean(ad + jnp.log1p(jnp.exp(-2.0 * ad)) - math.log(2.0))


if __name__ == "__main__":
    key = jax.random.PRNGKey(0)
    k1, k2, k3, k4 = jax.random.split(key, 4)

    loss_fn = LogCoshLoss()

    # NCHW-shaped example inputs (2048 elements -> exactly one aligned kernel tile).
    y_pred = jax.random.normal(k1, (2, 4, 16, 16), dtype=jnp.float32)
    y_true = jax.random.normal(k2, (2, 4, 16, 16), dtype=jnp.float32)
    out = jax.block_until_ready(loss_fn(y_pred, y_true))
    ref = _reference(y_pred, y_true)
    assert jnp.allclose(out, ref, rtol=1e-5, atol=1e-5), (out, ref)

    # Unaligned size: exercises the kernel prefix + wrapper tail path.
    yp2 = jax.random.normal(k3, (3, 5, 17, 19), dtype=jnp.float32)
    yt2 = jax.random.normal(k4, (3, 5, 17, 19), dtype=jnp.float32)
    out2 = jax.block_until_ready(loss_fn(yp2, yt2))
    ref2 = _reference(yp2, yt2)
    assert jnp.allclose(out2, ref2, rtol=1e-5, atol=1e-5), (out2, ref2)

    print("KERNEL_OK")
</pallas_src>

<mosaic_0001>
module attributes {stable_mosaic.version = 11 : i64} {
  func.func @_logcosh_partial_kernel(%arg0: i32, %arg1: i32, %arg2: memref<16x128xf32, #tpu.memory_space<vmem>>, %arg3: memref<16x128xf32, #tpu.memory_space<vmem>>, %arg4: memref<1x8x128xf32, #tpu.memory_space<vmem>>) attributes {dimension_semantics = [#tpu.dimension_semantics<parallel>, #tpu.dimension_semantics<arbitrary>], iteration_bounds = array<i64: 1, 1>, scalar_prefetch = 0 : i64, scratch_operands = 0 : i64, tpu.core_type = #tpu.core_type<tc>, window_params = [{transform_indices = @transform_0, window_bounds = array<i64: 16, 128>}, {transform_indices = @transform_1, window_bounds = array<i64: 16, 128>}, {transform_indices = @transform_2, window_bounds = array<i64: 1, 8, 128>}]} {
    %c0_i32 = arith.constant 0 : i32
    %0 = arith.cmpi eq, %arg1, %c0_i32 : i32
    %1 = arith.extui %0 : i1 to i32
    %c0_i32_0 = arith.constant 0 : i32
    %2 = arith.cmpi ne, %1, %c0_i32_0 : i32
    scf.if %2 {
      %cst_8 = arith.constant 0.000000e+00 : f32
      %22 = vector.broadcast %cst_8 : f32 to vector<1x8x128xf32>
      %c0_9 = arith.constant 0 : index
      %c0_10 = arith.constant 0 : index
      %c0_11 = arith.constant 0 : index
      %23 = vector.load %arg4[%c0_9, %c0_10, %c0_11] : memref<1x8x128xf32, #tpu.memory_space<vmem>>, vector<1x8x128xf32>
      tpu.vector_store %arg4[%c0_9, %c0_10, %c0_11], %22 {strides = array<i32>} : memref<1x8x128xf32, #tpu.memory_space<vmem>>, vector<1x8x128xf32>,
    } else {
    }
    %c0 = arith.constant 0 : index
    %c0_1 = arith.constant 0 : index
    %3 = vector.load %arg2[%c0, %c0_1] : memref<16x128xf32, #tpu.memory_space<vmem>>, vector<16x128xf32>
    %c0_2 = arith.constant 0 : index
    %c0_3 = arith.constant 0 : index
    %4 = vector.load %arg3[%c0_2, %c0_3] : memref<16x128xf32, #tpu.memory_space<vmem>>, vector<16x128xf32>
    %5 = arith.subf %3, %4 : vector<16x128xf32>
    %6 = math.absf %5 : vector<16x128xf32>
    %cst = arith.constant -2.000000e+00 : f32
    %7 = vector.broadcast %cst : f32 to vector<16x128xf32>
    %8 = arith.mulf %7, %6 : vector<16x128xf32>
    %9 = math.exp %8 : vector<16x128xf32>
    %10 = math.log1p %9 : vector<16x128xf32>
    %11 = arith.addf %6, %10 : vector<16x128xf32>
    %c1_i32 = arith.constant 1 : i32
    %12 = arith.muli %arg0, %c1_i32 : i32
    %13 = arith.addi %12, %arg1 : i32
    %c1_i32_4 = arith.constant 1 : i32
    %14 = arith.addi %13, %c1_i32_4 : i32
    %c16_i32 = arith.constant 16 : i32
    %15 = arith.muli %14, %c16_i32 : i32
    %c16_i32_5 = arith.constant 16 : i32
    %16 = arith.cmpi sle, %15, %c16_i32_5 : i32
    %17 = arith.extui %16 : i1 to i32
    %c0_i32_6 = arith.constant 0 : i32
    %18 = arith.cmpi ne, %17, %c0_i32_6 : i32
    scf.if %18 {
      %c0_8 = arith.constant 0 : index
      %c0_9 = arith.constant 0 : index
      %c0_10 = arith.constant 0 : index
      %22 = vector.load %arg4[%c0_8, %c0_9, %c0_10] : memref<1x8x128xf32, #tpu.memory_space<vmem>>, vector<1x8x128xf32>
      %23 = vector.shape_cast %22 : vector<1x8x128xf32> to vector<8x128xf32>
      %24 = vector.shape_cast %11 : vector<16x128xf32> to vector<2x8x128xf32>
      %cst_11 = arith.constant dense<0.000000e+00> : vector<8x128xf32>
      %25 = vector.multi_reduction <add>, %24, %cst_11 [0] : vector<2x8x128xf32> to vector<8x128xf32>
      %26 = arith.addf %23, %25 : vector<8x128xf32>
      %c0_12 = arith.constant 0 : index
      %c0_13 = arith.constant 0 : index
      %c0_14 = arith.constant 0 : index
      %27 = vector.load %arg4[%c0_12, %c0_13, %c0_14] : memref<1x8x128xf32, #tpu.memory_space<vmem>>, vector<1x8x128xf32>
      %28 = vector.shape_cast %27 : vector<1x8x128xf32> to vector<8x128xf32>
      %29 = vector.shape_cast %26 : vector<8x128xf32> to vector<1x8x128xf32>
      tpu.vector_store %arg4[%c0_12, %c0_13, %c0_14], %29 {strides = array<i32>} : memref<1x8x128xf32, #tpu.memory_space<vmem>>, vector<1x8x128xf32>,
    } else {
    }
    %true = arith.constant true
    %19 = arith.xori %16, %true : i1
    %20 = arith.extui %19 : i1 to i32
    %c0_i32_7 = arith.constant 0 : i32
    %21 = arith.cmpi ne, %20, %c0_i32_7 : i32
    scf.if %21 {
      %c16_i32_8 = arith.constant 16 : i32
      %22 = arith.muli %13, %c16_i32_8 : i32
      %23 = tpu.iota {dimensions = array<i32: 0>} : vector<16x128xi32>
      %24 = vector.broadcast %22 : i32 to vector<16x128xi32>
      %25 = arith.addi %24, %23 : vector<16x128xi32>
      %c0_9 = arith.constant 0 : index
      %c0_10 = arith.constant 0 : index
      %c0_11 = arith.constant 0 : index
      %26 = vector.load %arg4[%c0_9, %c0_10, %c0_11] : memref<1x8x128xf32, #tpu.memory_space<vmem>>, vector<1x8x128xf32>
      %27 = vector.shape_cast %26 : vector<1x8x128xf32> to vector<8x128xf32>
      %c16_i32_12 = arith.constant 16 : i32
      %28 = vector.broadcast %c16_i32_12 : i32 to vector<16x128xi32>
      %29 = arith.cmpi slt, %25, %28 : vector<16x128xi32>
      %cst_13 = arith.constant 0.000000e+00 : f32
      %30 = vector.broadcast %cst_13 : f32 to vector<16x128xf32>
      %31 = arith.select %29, %11, %30 : vector<16x128xi1>, vector<16x128xf32>
      %32 = vector.shape_cast %31 : vector<16x128xf32> to vector<2x8x128xf32>
      %cst_14 = arith.constant dense<0.000000e+00> : vector<8x128xf32>
      %33 = vector.multi_reduction <add>, %32, %cst_14 [0] : vector<2x8x128xf32> to vector<8x128xf32>
      %34 = arith.addf %27, %33 : vector<8x128xf32>
      %c0_15 = arith.constant 0 : index
      %c0_16 = arith.constant 0 : index
      %c0_17 = arith.constant 0 : index
      %35 = vector.load %arg4[%c0_15, %c0_16, %c0_17] : memref<1x8x128xf32, #tpu.memory_space<vmem>>, vector<1x8x128xf32>
      %36 = vector.shape_cast %35 : vector<1x8x128xf32> to vector<8x128xf32>
      %37 = vector.shape_cast %34 : vector<8x128xf32> to vector<1x8x128xf32>
      tpu.vector_store %arg4[%c0_15, %c0_16, %c0_17], %37 {strides = array<i32>} : memref<1x8x128xf32, #tpu.memory_space<vmem>>, vector<1x8x128xf32>,
    } else {
    }
    return
  }
  func.func @transform_0(%arg0: i32, %arg1: i32) -> (i32, i32) {
    %c1_i32 = arith.constant 1 : i32
    %0 = arith.muli %arg0, %c1_i32 : i32
    %1 = arith.addi %0, %arg1 : i32
    %c0_i32 = arith.constant 0 : i32
    %2 = arith.minsi %1, %c0_i32 : i32
    %c0_i32_0 = arith.constant 0 : i32
    %c0_i32_1 = arith.constant 0 : i32
    return %2, %c0_i32_0 : i32, i32
  }
  func.func @transform_1(%arg0: i32, %arg1: i32) -> (i32, i32) {
    %c1_i32 = arith.constant 1 : i32
    %0 = arith.muli %arg0, %c1_i32 : i32
    %1 = arith.addi %0, %arg1 : i32
    %c0_i32 = arith.constant 0 : i32
    %2 = arith.minsi %1, %c0_i32 : i32
    %c0_i32_0 = arith.constant 0 : i32
    %c0_i32_1 = arith.constant 0 : i32
    return %2, %c0_i32_0 : i32, i32
  }
  func.func @transform_2(%arg0: i32, %arg1: i32) -> (i32, i32, i32) {
    %c0_i32 = arith.constant 0 : i32
    %c0_i32_0 = arith.constant 0 : i32
    %c0_i32_1 = arith.constant 0 : i32
    return %arg0, %c0_i32, %c0_i32_0 : i32, i32, i32
  }
}

</mosaic_0001>

<llo_original>
// kernel: _log_cosh_loss_impl.1
$region0: #{_log_cosh_loss_impl.1}
  #allocation0 [shape = 'u32[]', space=smem, size = 0x4, offset = 0x4, fixed_abs, tag = 'smem constant byte address 0x4 - core index']
  #allocation1 [shape = 'u32[144,128]{1,0:T(1,128)}', space=vmem, size = 0x12000, scoped, tag = 'internal scratch']
  %s0 = inlined_call_operand.vmem [shape: f32[16,128], index: 0, kind: input, shape index: {}]
  %s1 = inlined_call_operand.vmem [shape: f32[16,128], index: 1, kind: input, shape index: {}]
  %s2 = inlined_call_operand.vmem [shape: f32[1,8,128], index: 2, kind: output, shape index: {}]
  %s3 = sld [smem:[#allocation0]]
  $region30: #{_log_cosh_loss_impl.1} parent=0
    _
  %s5 = ssub.s32 1, %s3
  %s6 = scalar_select 0, %s5, %s3
  // Predicated region
  $region2: #{_log_cosh_loss_impl.1} parent=0 // pred_check
    _
  $region3: #{_log_cosh_loss_impl.1} parent=0 // pred_check_branch
    %8 = sbr.rel (0) target = $region5
  $region4: #{_log_cosh_loss_impl.1} parent=0 // pred_region
    %s9 = sadd.s32 0, 0
    %p10 = scmp.lt.s32.totalorder %s9, 0
    %s11 = scalar_select %p10, %s9, 0
    %s12 = smul.u32 2, %s11
    %p13 = scmp.lt.s32.totalorder %s12, 1
    %s14 = scalar_select %p13, %s12, 1
    %s15 = smul.addr %s14, 8
    %s16 = scalar_lea.vmem %s0, %s15
    %s17 = sadd.s32 0, 0
    %p18 = scmp.lt.s32.totalorder %s17, 0
    %s19 = scalar_select %p18, %s17, 0
    %s20 = smul.u32 2, %s19
  $region5: #{_log_cosh_loss_impl.1} parent=0 // pred_fallthru
    _
  // Predicated region
  $region6: #{_log_cosh_loss_impl.1} parent=0 // pred_check
    _
  $region7: #{_log_cosh_loss_impl.1} parent=0 // pred_check_branch
    %22 = sbr.rel (0) target = $region9
  $region8: #{_log_cosh_loss_impl.1} parent=0 // pred_region
    %s23 = sadd.s32 0, 0
    %p24 = scmp.lt.s32.totalorder %s23, 0
    %s25 = scalar_select %p24, %s23, 0
    %s26 = smul.u32 2, %s25
    %p27 = scmp.lt.s32.totalorder %s26, 1
    %s28 = scalar_select %p27, %s26, 1
    %s29 = smul.addr %s28, 8
    %s30 = scalar_lea.vmem %s1, %s29
    %s31 = sadd.s32 0, 0
    %p32 = scmp.lt.s32.totalorder %s31, 0
    %s33 = scalar_select %p32, %s31, 0
    %s34 = smul.u32 2, %s33
  $region9: #{_log_cosh_loss_impl.1} parent=0 // pred_fallthru
    _
  %s35 = sadd.s32 0, 0
  %p36 = scmp.lt.s32.totalorder %s35, 0
  %s37 = scalar_select %p36, %s35, 0
  %s38 = smul.u32 2, %s37
  %p39 = scmp.lt.s32.totalorder %s38, 1
  %s40 = scalar_select %p39, %s38, 1
  %s41 = smul.addr %s40, 8
  %s42 = scalar_lea.vmem %s0, %s41
  %s43 = sadd.s32 0, 0
  %p44 = scmp.lt.s32.totalorder %s43, 0
  %s45 = scalar_select %p44, %s43, 0
  %s46 = smul.u32 2, %s45
  %p47 = scmp.lt.s32.totalorder %s46, 1
  %s48 = scalar_select %p47, %s46, 1
  %s49 = smul.addr %s48, 8
  %s50 = scalar_lea.vmem %s1, %s49
  %s51 = sadd.s32 0, 0
  %p52 = scmp.lt.s32.totalorder %s51, 0
  %s53 = scalar_select %p52, %s51, 0
  %s54 = smul.u32 2, %s53
  %p55 = scmp.lt.s32.totalorder %s54, 1
  %s56 = scalar_select %p55, %s54, 1
  %s57 = smul.addr %s56, 8
  %s58 = scalar_lea.vmem %s0, %s57
  %s59 = sadd.s32 0, 0
  %p60 = scmp.lt.s32.totalorder %s59, 0
  %s61 = scalar_select %p60, %s59, 0
  %s62 = smul.u32 2, %s61
  %s63 = sadd.s32 0, 0
  %p64 = scmp.lt.s32.totalorder %s63, 0
  %s65 = scalar_select %p64, %s63, 0
  %s66 = smul.u32 2, %s65
  %p67 = scmp.lt.s32.totalorder %s66, 1
  %s68 = scalar_select %p67, %s66, 1
  %s69 = smul.addr %s68, 8
  %s70 = scalar_lea.vmem %s1, %s69
  %s71 = sadd.s32 0, 0
  %p72 = scmp.lt.s32.totalorder %s71, 0
  %s73 = scalar_select %p72, %s71, 0
  %s74 = smul.u32 2, %s73
  %p75 = scmp.eq.s32.totalorder 0, 0
  // Predicated region
  $region10: #{_log_cosh_loss_impl.1} parent=0 // pred_check
    %p76 = pneg %p75
  $region11: #{_log_cosh_loss_impl.1} parent=0 // pred_check_branch
    %78 = sbr.rel (%p76) target = $region13
  $region12: #{_log_cosh_loss_impl.1} parent=0 // pred_region
    %79 = vst [vmem:[%s2] sm:$0xff] 0.0
  $region13: #{_log_cosh_loss_impl.1} parent=0 // pred_fallthru
    _
  %v80 = vld [vmem:[%s58] sm:$0xff]
  %v81 = vld [vmem:[%s58 + $0x8] sm:$0xff]
  %v82 = vld [vmem:[%s70] sm:$0xff]
  %v83 = vld [vmem:[%s70 + $0x8] sm:$0xff]
  %v84 = vsub.f32 %v80, %v82
  %v85 = vsub.f32 %v81, %v83
  %v86 = vand.u32 2147483647, %v84
  %v87 = vand.u32 2147483647, %v85
  %v88 = vmul.f32 %v86, -2.0
  %v89 = vmul.f32 %v87, -2.0
  %v90 = vmul.f32 %v88, 1.442695
  %v91 = vpow.pop %v90
  %v92 = vmul.f32 %v89, 1.442695
  %v93 = vpow.pop %v92
  %v94 = vadd.f32 %v91, 1.0
  %v95 = vlog2.pop %v94
  %v96 = vmul.f32 %v95, 0.6931472
  %v97 = vmul.f32 -0.5, %v91
  %v98 = vadd.f32 %v97, 1.0
  %v99 = vmul.f32 %v98, %v91
  %v100 = vand.u32 2147483647, %v91
  %vm101 = vcmp.lt.f32.partialorder %v100, 0.0004427343
  %v102 = vsel %vm101, %v99, %v96
  %v103 = vadd.f32 %v93, 1.0
  %v104 = vlog2.pop %v103
  %v105 = vmul.f32 %v104, 0.6931472
  %v106 = vmul.f32 -0.5, %v93
  %v107 = vadd.f32 %v106, 1.0
  %v108 = vmul.f32 %v107, %v93
  %v109 = vand.u32 2147483647, %v93
  %vm110 = vcmp.lt.f32.partialorder %v109, 0.0004427343
  %v111 = vsel %vm110, %v108, %v105
  %v112 = vadd.f32 %v86, %v102
  %v113 = vadd.f32 %v87, %v111
  %s114 = sadd.s32 0, 0
  %s115 = sadd.s32 %s114, 1
  %s116 = smul.u32 %s115, 16
  %p117 = scmp.le.s32.totalorder %s116, 16
  // Predicated region
  $region14: #{_log_cosh_loss_impl.1} parent=0 // pred_check
    %p118 = pneg %p117
  $region15: #{_log_cosh_loss_impl.1} parent=0 // pred_check_branch
    %120 = sbr.rel (%p118) target = $region17
  $region16: #{_log_cosh_loss_impl.1} parent=0 // pred_region
    %v121 = vld [vmem:[%s2] sm:$0xff]
    %v122 = vadd.f32 %v112, %v113
    %v123 = vadd.f32 %v121, %v122
    %124 = vst [vmem:[%s2] sm:$0xff] %v123
  $region17: #{_log_cosh_loss_impl.1} parent=0 // pred_fallthru
    _
  %p125 = scmp.gt.s32.totalorder %s116, 16
  // Predicated region
  $region18: #{_log_cosh_loss_impl.1} parent=0 // pred_check
    %p126 = pneg %p125
  $region19: #{_log_cosh_loss_impl.1} parent=0 // pred_check_branch
    %128 = sbr.rel (%p126) target = $region21
  $region20: #{_log_cosh_loss_impl.1} parent=0 // pred_region
    %s129 = smul.u32 %s114, 16
    %v130 = vlaneseq
    %v131 = vshrl.u32 %v130, 7
    %v132 = vadd.s32 %v131, 8
    %v133 = vstv %s129
    %v134 = vadd.s32 %v133, %v131
    %v135 = vadd.s32 %v133, %v132
    %v136 = vld [vmem:[%s2] sm:$0xff]
    %vm137 = vcmp.lt.s32.totalorder %v134, 16
    %vm138 = vcmp.lt.s32.totalorder %v135, 16
    %v139 = vsel %vm137, %v112, 0.0
    %v140 = vsel %vm138, %v113, 0.0
    %v141 = vadd.f32 %v139, %v140
    %v142 = vadd.f32 %v136, %v141
    %143 = vst [vmem:[%s2] sm:$0xff] %v142
  $region21: #{_log_cosh_loss_impl.1} parent=0 // pred_fallthru
    _
  // Predicated region
  $region22: #{_log_cosh_loss_impl.1} parent=0 // pred_check
    _
  $region23: #{_log_cosh_loss_impl.1} parent=0 // pred_check_branch
    %145 = sbr.rel (0) target = $region25
  $region24: #{_log_cosh_loss_impl.1} parent=0 // pred_region
    _
  $region25: #{_log_cosh_loss_impl.1} parent=0 // pred_fallthru
    _
  // Predicated region
  $region26: #{_log_cosh_loss_impl.1} parent=0 // pred_check
    _
  $region27: #{_log_cosh_loss_impl.1} parent=0 // pred_check_branch
    %147 = sbr.rel (0) target = $region29
  $region28: #{_log_cosh_loss_impl.1} parent=0 // pred_region
    _
  $region29: #{_log_cosh_loss_impl.1} parent=0 // pred_fallthru
    _

</llo_original>
